<compile_context>
chip_gen: v7x
topology: tpu7x:2x2x1
jax: 0.10.0
libtpu: 0.0.40
codegen_flags: <defaults>
</compile_context>

<pallas_src>
import jax
import jax.numpy as jnp
from jax.experimental import pallas as pl
from jax.experimental.pallas import tpu as pltpu

_LANE = 128
_SUBLANE = 8
_MAX_TILE_BYTES = 4 * 1024 * 1024     # ~4 MiB per in/out block: past the point
                                      # where tiled mem-bound kernels hit ~85%+
                                      # of HBM roofline.


def _vmem_capacity_bytes() -> int:
    """Per-core physical VMEM; falls back to the smallest gen (v7x, 64 MiB)."""
    try:
        cap = getattr(pltpu.get_tpu_info(), "vmem_capacity_bytes", None)
        if cap:
            return int(cap)
    except Exception:
        pass
    return 64 * 1024 * 1024


def _budgets(C: int):
    cap = _vmem_capacity_bytes()
    vmem_limit = (3 * cap) // 4                 # raise above scoped default,
                                                # keep >=25% headroom vs physical
    tile_budget = vmem_limit // 2               # slack for compiler scratch
    # footprint: 2x double-buffered (in + out) f32 tiles -> 16*C bytes per
    # lane-column/row, plus 2 weight buffers + bias.
    avail = tile_budget - 2 * C * C * 4 - 16 * C
    return avail, vmem_limit


def _spatial_tile(S: int, C: int):
    """Tile length along the flattened spatial (lane) axis for the 4D path."""
    avail, vmem_limit = _budgets(C)
    ts = max(_LANE, avail // (16 * C))
    ts = min(ts, max(_LANE, _MAX_TILE_BYTES // (4 * C)))
    if ts >= S:
        return S, vmem_limit                    # full extent: always a legal block
    ts = max(_LANE, (ts // _LANE) * _LANE)      # partial tiling: multiple of 128
    return ts, vmem_limit


def _row_tile(M: int, C: int):
    """Row-tile size for the 2D (M, C) path."""
    avail, vmem_limit = _budgets(C)
    tm = max(_SUBLANE, avail // (16 * C))
    tm = min(tm, max(_SUBLANE, _MAX_TILE_BYTES // (4 * C)))
    if tm >= M:
        return M, vmem_limit
    tm = max(_SUBLANE, (tm // _SUBLANE) * _SUBLANE)
    return tm, vmem_limit


# ---------------------------------------------------------------------------
# Kernels
# ---------------------------------------------------------------------------

def _divnorm_nchw_kernel(x_ref, wt_ref, b_ref, o_ref):
    # x_ref : (1, C, TS) tile of x (spatial flattened, lane-dense on spatial)
    # wt_ref: (C, C) = relu(weight).T  (precomputed, VMEM-resident)
    # b_ref : (C, 1)
    xr = jnp.maximum(x_ref[0].astype(jnp.float32), 0.0)            # relu(x), (C, TS)
    xdiv = jnp.dot(wt_ref[...], xr,                                 # (C, TS) channel mix
                   preferred_element_type=jnp.float32,
                   precision=jax.lax.Precision.HIGHEST)
    xdiv = jnp.maximum(xdiv + b_ref[...], 0.001)                    # + bias, clamp_(0.001)
    # approx=True would push the reciprocal to the EUP (~2^-12 rel err) — kept
    # exact to preserve the module's 1e-5-tight semantics.
    o_ref[0] = (xr * pl.reciprocal(xdiv, approx=False)).astype(o_ref.dtype)


def _divnorm_nc_kernel(x_ref, w_ref, b_ref, o_ref):
    # x_ref: (TM, C); w_ref: (C, C) = relu(weight); b_ref: (1, C)
    xr = jnp.maximum(x_ref[...].astype(jnp.float32), 0.0)
    xdiv = jnp.dot(xr, w_ref[...],
                   preferred_element_type=jnp.float32,
                   precision=jax.lax.Precision.HIGHEST)
    xdiv = jnp.maximum(xdiv + b_ref[...], 0.001)
    o_ref[...] = (xr * pl.reciprocal(xdiv, approx=False)).astype(o_ref.dtype)


# ---------------------------------------------------------------------------
# Wrappers
# ---------------------------------------------------------------------------

def _divnorm_nchw(x, weight, bias):
    N, C, H, W = x.shape
    S = H * W
    TS, vmem_limit = _spatial_tile(S, C)

    x3 = x.reshape(N, C, S)                                   # free (contiguous), no transpose
    w_pos_t = jnp.maximum(weight, 0.0).T.astype(jnp.float32)  # relu(weight).T, tiny (C,C), once
    bias_col = bias.reshape(C, 1).astype(jnp.float32)

    out = pl.pallas_call(
        _divnorm_nchw_kernel,
        out_shape=jax.ShapeDtypeStruct((N, C, S), x.dtype),
        grid_spec=pltpu.PrefetchScalarGridSpec(
            num_scalar_prefetch=0,
            grid=(N, pl.cdiv(S, TS)),                         # ragged last block: masked writes
            in_specs=[
                pl.BlockSpec((1, C, TS), lambda n, s: (n, 0, s)),   # x tile
                pl.BlockSpec((C, C), lambda n, s: (0, 0)),          # weight (resident)
                pl.BlockSpec((C, 1), lambda n, s: (0, 0)),          # bias   (resident)
            ],
            out_specs=pl.BlockSpec((1, C, TS), lambda n, s: (n, 0, s)),
        ),
        compiler_params=pltpu.CompilerParams(
            dimension_semantics=("parallel", "parallel"),     # megacore-shardable
            vmem_limit_bytes=int(vmem_limit),
        ),
    )(x3, w_pos_t, bias_col)

    return out.reshape(N, C, H, W)


def _divnorm_nc(x, weight, bias):
    M, C = x.shape
    TM, vmem_limit = _row_tile(M, C)

    w_pos = jnp.maximum(weight, 0.0).astype(jnp.float32)
    bias_row = bias.reshape(1, C).astype(jnp.float32)

    return pl.pallas_call(
        _divnorm_nc_kernel,
        out_shape=jax.ShapeDtypeStruct((M, C), x.dtype),
        grid_spec=pltpu.PrefetchScalarGridSpec(
            num_scalar_prefetch=0,
            grid=(pl.cdiv(M, TM),),                           # no jnp.pad
            in_specs=[
                pl.BlockSpec((TM, C), lambda i: (i, 0)),
                pl.BlockSpec((C, C), lambda i: (0, 0)),
                pl.BlockSpec((1, C), lambda i: (0, 0)),
            ],
            out_specs=pl.BlockSpec((TM, C), lambda i: (i, 0)),
        ),
        compiler_params=pltpu.CompilerParams(
            dimension_semantics=("parallel",),
            vmem_limit_bytes=int(vmem_limit),
        ),
    )(x, w_pos, bias_row)


@jax.jit
def divnorm_forward(x, weight, bias):
    """Matches divNorm.forward for 4D (NCHW) and 2D (N, C) inputs."""
    if x.ndim == 4:
        return _divnorm_nchw(x, weight, bias)
    if x.ndim == 2:
        return _divnorm_nc(x, weight, bias)
    # TODO(synk): generic 'nc...' einsum for arbitrary trailing dims not implemented (only 2D/4D).
    raise NotImplementedError("divnorm_forward supports 2D or 4D inputs")


# ---------------------------------------------------------------------------
# Reference + self-test
# ---------------------------------------------------------------------------

def _reference(x, weight, bias):
    pw = jnp.maximum(weight, 0.0)
    xr = jnp.maximum(x, 0.0)
    if x.ndim == 4:
        xdiv = jnp.einsum('nchw,ck->nkhw', xr, pw,
                          precision=jax.lax.Precision.HIGHEST)
        xdiv = xdiv + bias[None, :, None, None]
    else:
        xdiv = jnp.dot(xr, pw, precision=jax.lax.Precision.HIGHEST)
        xdiv = xdiv + bias[None, :]
    return xr / jnp.maximum(xdiv, 0.001)


if __name__ == "__main__":
    key = jax.random.PRNGKey(0)
    k4, k2 = jax.random.split(key)

    # 4D NCHW case (the module's conv-feature-map path).
    N, C, H, W = 2, 4, 16, 16
    x4 = jax.random.normal(k4, (N, C, H, W), dtype=jnp.float32)

    # Deterministic params matching divNorm.reset_parameters().
    weight = jnp.ones((C, C), dtype=jnp.float32)      # weight[:] = 1.0
    bias = jnp.full((C,), 0.5, dtype=jnp.float32)     # bias[:]   = 0.5

    out4 = jax.block_until_ready(divnorm_forward(x4, weight, bias))
    ref4 = _reference(x4, weight, bias)
    assert out4.shape == (N, C, H, W)
    assert jnp.allclose(out4, ref4, atol=1e-5, rtol=1e-5), "4D mismatch vs reference"

    # 2D (N, C) case (the module's non-4D bias branch).
    x2 = jax.random.normal(k2, (256, C), dtype=jnp.float32)
    out2 = jax.block_until_ready(divnorm_forward(x2, weight, bias))
    ref2 = _reference(x2, weight, bias)
    assert out2.shape == x2.shape
    assert jnp.allclose(out2, ref2, atol=1e-5, rtol=1e-5), "2D mismatch vs reference"

    print("KERNEL_OK")
</pallas_src>

<mosaic_0001>
module attributes {stable_mosaic.version = 11 : i64} {
  func.func @_divnorm_nchw_kernel(%arg0: i32, %arg1: i32, %arg2: memref<1x4x256xf32, #tpu.memory_space<vmem>>, %arg3: memref<4x4xf32, #tpu.memory_space<vmem>>, %arg4: memref<4x1xf32, #tpu.memory_space<vmem>>, %arg5: memref<1x4x256xf32, #tpu.memory_space<vmem>>) attributes {dimension_semantics = [#tpu.dimension_semantics<parallel>, #tpu.dimension_semantics<parallel>], iteration_bounds = array<i64: 2, 1>, scalar_prefetch = 0 : i64, scratch_operands = 0 : i64, tpu.core_type = #tpu.core_type<tc>, window_params = [{transform_indices = @transform_0, window_bounds = array<i64: 1, 4, 256>}, {pipeline_mode = #tpu.pipeline_mode<synchronous>, transform_indices = @transform_1, window_bounds = array<i64: 4, 4>}, {pipeline_mode = #tpu.pipeline_mode<synchronous>, transform_indices = @transform_2, window_bounds = array<i64: 4, 1>}, {transform_indices = @transform_3, window_bounds = array<i64: 1, 4, 256>}]} {
    %c0 = arith.constant 0 : index
    %c0_0 = arith.constant 0 : index
    %c0_1 = arith.constant 0 : index
    %0 = vector.load %arg2[%c0, %c0_0, %c0_1] : memref<1x4x256xf32, #tpu.memory_space<vmem>>, vector<1x4x256xf32>
    %1 = vector.shape_cast %0 : vector<1x4x256xf32> to vector<4x256xf32>
    %cst = arith.constant 0.000000e+00 : f32
    %2 = vector.broadcast %cst : f32 to vector<4x256xf32>
    %3 = arith.maximumf %1, %2 : vector<4x256xf32>
    %c0_2 = arith.constant 0 : index
    %c0_3 = arith.constant 0 : index
    %4 = vector.load %arg3[%c0_2, %c0_3] : memref<4x4xf32, #tpu.memory_space<vmem>>, vector<4x4xf32>
    %cst_4 = arith.constant dense<0.000000e+00> : vector<4x256xf32>
    %5 = tpu.matmul %4, %3, %cst_4 {dimension_numbers = #tpu.dot_dimension_numbers<[1], [0], [0], [1], [0, 0, 1, 1], [], []>, precision = #tpu.contract_precision<fp32>} : vector<4x4xf32>, vector<4x256xf32>, vector<4x256xf32> -> vector<4x256xf32>
    %c0_5 = arith.constant 0 : index
    %c0_6 = arith.constant 0 : index
    %6 = vector.load %arg4[%c0_5, %c0_6] : memref<4x1xf32, #tpu.memory_space<vmem>>, vector<4x1xf32>
    %7 = vector.broadcast %6 : vector<4x1xf32> to vector<4x256xf32>
    %8 = arith.addf %5, %7 : vector<4x256xf32>
    %cst_7 = arith.constant 1.000000e-03 : f32
    %9 = vector.broadcast %cst_7 : f32 to vector<4x256xf32>
    %10 = arith.maximumf %8, %9 : vector<4x256xf32>
    %11 = tpu.reciprocal %10 : vector<4x256xf32> -> vector<4x256xf32>
    %12 = arith.mulf %3, %11 : vector<4x256xf32>
    %c0_8 = arith.constant 0 : index
    %c0_9 = arith.constant 0 : index
    %c0_10 = arith.constant 0 : index
    %13 = vector.load %arg5[%c0_8, %c0_9, %c0_10] : memref<1x4x256xf32, #tpu.memory_space<vmem>>, vector<1x4x256xf32>
    %14 = vector.shape_cast %13 : vector<1x4x256xf32> to vector<4x256xf32>
    %15 = vector.shape_cast %12 : vector<4x256xf32> to vector<1x4x256xf32>
    tpu.vector_store %arg5[%c0_8, %c0_9, %c0_10], %15 {strides = array<i32>} : memref<1x4x256xf32, #tpu.memory_space<vmem>>, vector<1x4x256xf32>,
    return
  }
  func.func @transform_0(%arg0: i32, %arg1: i32) -> (i32, i32, i32) {
    %c0_i32 = arith.constant 0 : i32
    %c0_i32_0 = arith.constant 0 : i32
    return %arg0, %c0_i32, %arg1 : i32, i32, i32
  }
  func.func @transform_1(%arg0: i32, %arg1: i32) -> (i32, i32) {
    %c0_i32 = arith.constant 0 : i32
    %c0_i32_0 = arith.constant 0 : i32
    %c0_i32_1 = arith.constant 0 : i32
    return %c0_i32, %c0_i32_0 : i32, i32
  }
  func.func @transform_2(%arg0: i32, %arg1: i32) -> (i32, i32) {
    %c0_i32 = arith.constant 0 : i32
    %c0_i32_0 = arith.constant 0 : i32
    %c0_i32_1 = arith.constant 0 : i32
    return %c0_i32, %c0_i32_0 : i32, i32
  }
  func.func @transform_3(%arg0: i32, %arg1: i32) -> (i32, i32, i32) {
    %c0_i32 = arith.constant 0 : i32
    %c0_i32_0 = arith.constant 0 : i32
    return %arg0, %c0_i32, %arg1 : i32, i32, i32
  }
}

</mosaic_0001>

<llo_original>
// kernel: divnorm_forward.1
$region0: #{divnorm_forward.1}
  #allocation0 [shape = 'u32[]', space=smem, size = 0x4, offset = 0x4, fixed_abs, tag = 'smem constant byte address 0x4 - core index']
  #allocation1 [shape = 'u32[144,128]{1,0:T(1,128)}', space=vmem, size = 0x12000, scoped, tag = 'internal scratch']
  %s0 = inlined_call_operand.vmem [shape: f32[2,4,256], index: 0, kind: input, shape index: {}]
  %s1 = inlined_call_operand.vmem [shape: f32[4,4], index: 1, kind: input, shape index: {}]
  %s2 = inlined_call_operand.vmem [shape: f32[4,1], index: 2, kind: input, shape index: {}]
  %s3 = inlined_call_operand.vmem [shape: f32[2,4,256], index: 3, kind: output, shape index: {}]
  %s4 = sld [smem:[#allocation0]]
  $region45: #{divnorm_forward.1} parent=0
    _
  %s6 = ssub.s32 1, %s4
  %s7 = scalar_select 0, %s6, %s4
  loop: start=0, step=1, limit=4
  $region2: #{divnorm_forward.1} parent=0 // loop_pre_header
    _
  $region3: #{divnorm_forward.1} parent=0 // loop_header
    %s9 = sphi 0, %s13
    %p10 = scmp.ge.s32.totalorder %s9, 4
    %s16 = sphi 0, %s28
    %s17 = sphi 0, %s24
    %s18 = sphi 0, %s16
    %s19 = sphi 0, %s17
    %s20 = sphi 0, %s18
    %s21 = sphi 0, %s19
    %s33 = sphi 0, %s35
    %s36 = sphi 0, %s33
    %s37 = sphi 0, %s36
    %s53 = sphi 0, %s37
    %s57 = sphi 0, %s57
    %s59 = sphi 0, %s57
    %s60 = sphi 0, %s59
    %s74 = sphi 0, %s60
    %s78 = sphi 0, %s78
    %s80 = sphi 0, %s78
    %s81 = sphi 0, %s80
    %s95 = sphi 0, %s81
    %s103 = sphi 0, %s105
    %s106 = sphi 0, %s103
    %s107 = sphi 0, %s106
    %s123 = sphi 0, %s107
  $region4: #{divnorm_forward.1} parent=0 // loop_header_branch
    %12 = sbr.rel (%p10) target = $region8
  $region5: #{divnorm_forward.1} parent=0 // loop_body
    %s14 = ssub.s32 %s9, 1
    %s15 = ssub.s32 %s9, 2
    %s22 = sadd.s32 1, %s17
    %p23 = scmp.ge.s32.totalorder %s22, 1
    %s24 = scalar_select %p23, 0, %s22
    %s25 = sadd.s32 1, %s16
    %s26 = scalar_select %p23, %s25, %s16
    %p27 = scmp.ge.s32.totalorder %s26, 2
    %s28 = scalar_select %p27, 0, %s26
    %s29 = ssub.s32 %s16, %s28
    %s30 = ssub.s32 %s17, %s24
    %s31 = sor.u32 %s29, %s30
    %p32 = scmp.eq.s32.totalorder %s31, 0
    %s34 = sadd.s32 %s33, 1
    %s35 = scalar_select %p32, %s33, %s34
    %p38 = pneg %p32
    %p39 = scmp.eq.s32.totalorder %s9, 1
    %p40 = por %p38, %p39
    %p41 = scmp.ne.s32.totalorder %s33, %s36
    %p42 = scmp.eq.s32.totalorder %s9, 0
    %p43 = por %p41, %p42
    %p44 = scmp.ne.s32.totalorder %s33, %s36
    %p45 = scmp.eq.s32.totalorder %s14, 1
    %p46 = por %p44, %p45
    %p47 = scmp.ne.s32.totalorder %s36, %s37
    %p48 = scmp.eq.s32.totalorder %s14, 0
    %p49 = por %p47, %p48
    %p50 = scmp.ne.s32.totalorder %s36, %s37
    %p51 = scmp.eq.s32.totalorder %s15, 1
    %p52 = por %p50, %p51
    %p54 = scmp.ne.s32.totalorder %s37, %s53
    %p55 = scmp.eq.s32.totalorder %s15, 0
    %p56 = por %p54, %p55
    %s58 = sadd.s32 %s57, 1
    %p61 = scmp.eq.s32.totalorder %s9, 1
    %p62 = scmp.ne.s32.totalorder %s57, %s59
    %p63 = scmp.eq.s32.totalorder %s9, 0
    %p64 = por %p62, %p63
    %p65 = scmp.ne.s32.totalorder %s57, %s59
    %p66 = scmp.eq.s32.totalorder %s14, 1
    %p67 = por %p65, %p66
    %p68 = scmp.ne.s32.totalorder %s59, %s60
    %p69 = scmp.eq.s32.totalorder %s14, 0
    %p70 = por %p68, %p69
    %p71 = scmp.ne.s32.totalorder %s59, %s60
    %p72 = scmp.eq.s32.totalorder %s15, 1
    %p73 = por %p71, %p72
    %p75 = scmp.ne.s32.totalorder %s60, %s74
    %p76 = scmp.eq.s32.totalorder %s15, 0
    %p77 = por %p75, %p76
    %s79 = sadd.s32 %s78, 1
    %p82 = scmp.eq.s32.totalorder %s9, 1
    %p83 = scmp.ne.s32.totalorder %s78, %s80
    %p84 = scmp.eq.s32.totalorder %s9, 0
    %p85 = por %p83, %p84
    %p86 = scmp.ne.s32.totalorder %s78, %s80
    %p87 = scmp.eq.s32.totalorder %s14, 1
    %p88 = por %p86, %p87
    %p89 = scmp.ne.s32.totalorder %s80, %s81
    %p90 = scmp.eq.s32.totalorder %s14, 0
    %p91 = por %p89, %p90
    %p92 = scmp.ne.s32.totalorder %s80, %s81
    %p93 = scmp.eq.s32.totalorder %s15, 1
    %p94 = por %p92, %p93
    %p96 = scmp.ne.s32.totalorder %s81, %s95
    %p97 = scmp.eq.s32.totalorder %s15, 0
    %p98 = por %p96, %p97
    %s99 = ssub.s32 %s16, %s28
    %s100 = ssub.s32 %s17, %s24
    %s101 = sor.u32 %s99, %s100
    %p102 = scmp.eq.s32.totalorder %s101, 0
    %s104 = sadd.s32 %s103, 1
    %s105 = scalar_select %p102, %s103, %s104
    %p108 = pneg %p102
    %p109 = scmp.eq.s32.totalorder %s9, 1
    %p110 = por %p108, %p109
    %p111 = scmp.ne.s32.totalorder %s103, %s106
    %p112 = scmp.eq.s32.totalorder %s9, 0
    %p113 = por %p111, %p112
    %p114 = scmp.ne.s32.totalorder %s103, %s106
    %p115 = scmp.eq.s32.totalorder %s14, 1
    %p116 = por %p114, %p115
    %p117 = scmp.ne.s32.totalorder %s106, %s107
    %p118 = scmp.eq.s32.totalorder %s14, 0
    %p119 = por %p117, %p118
    %p120 = scmp.ne.s32.totalorder %s106, %s107
    %p121 = scmp.eq.s32.totalorder %s15, 1
    %p122 = por %p120, %p121
    %p124 = scmp.ne.s32.totalorder %s107, %s123
    %p125 = scmp.eq.s32.totalorder %s15, 0
    %p126 = por %p124, %p125
    %p127 = scmp.le.s32.totalorder 1, %s9
    %p128 = scmp.lt.s32.totalorder %s9, 3
    %p129 = pnand %p127, %p128
    %p130 = pneg %p129
    // Predicated region
    $region9: #{divnorm_forward.1} parent=5 // pred_check
      _
    $region10: #{divnorm_forward.1} parent=5 // pred_check_branch
      %132 = sbr.rel (%p129) target = $region12
    $region11: #{divnorm_forward.1} parent=5 // pred_region
      %s133 = ssub.s32 %s9, 1
      // Predicated region
      $region13: #{divnorm_forward.1} parent=11 // pred_check
        %p134 = pneg %p70
      $region14: #{divnorm_forward.1} parent=11 // pred_check_branch
        %136 = sbr.rel (%p134) target = $region16
      $region15: #{divnorm_forward.1} parent=11 // pred_region
        _
      $region16: #{divnorm_forward.1} parent=11 // pred_fallthru
        _
      // Predicated region
      $region17: #{divnorm_forward.1} parent=11 // pred_check
        %p137 = pneg %p91
      $region18: #{divnorm_forward.1} parent=11 // pred_check_branch
        %139 = sbr.rel (%p137) target = $region20
      $region19: #{divnorm_forward.1} parent=11 // pred_region
        _
      $region20: #{divnorm_forward.1} parent=11 // pred_fallthru
        _
    $region12: #{divnorm_forward.1} parent=5 // pred_fallthru
      _
    %p140 = scmp.lt.s32.totalorder %s9, 2
    // Predicated region
    $region21: #{divnorm_forward.1} parent=5 // pred_check
      %p141 = pneg %p140
    $region22: #{divnorm_forward.1} parent=5 // pred_check_branch
      %143 = sbr.rel (%p141) target = $region24
    $region23: #{divnorm_forward.1} parent=5 // pred_region
      // Predicated region
      $region25: #{divnorm_forward.1} parent=23 // pred_check
        %p144 = pneg %p43
      $region26: #{divnorm_forward.1} parent=23 // pred_check_branch
        %146 = sbr.rel (%p144) target = $region28
      $region27: #{divnorm_forward.1} parent=23 // pred_region
        %s147 = smul.u32 2, %s17
        %p148 = scmp.lt.s32.totalorder %s16, 1
        %s149 = scalar_select %p148, %s16, 1
        %p150 = scmp.lt.s32.totalorder %s147, 1
        %s151 = scalar_select %p150, %s147, 1
        %s152 = smul.addr %s149, 2
        %s153 = sadd.s32 %s151, %s152
        %s154 = smul.addr %s153, 4
        %s155 = scalar_lea.vmem %s0, %s154
        %s156 = smul.u32 2, %s17
      $region28: #{divnorm_forward.1} parent=23 // pred_fallthru
        _
    $region24: #{divnorm_forward.1} parent=5 // pred_fallthru
      _
    %p157 = scmp.le.s32.totalorder 1, %s9
    %p158 = scmp.lt.s32.totalorder %s9, 3
    %p159 = pnand %p157, %p158
    %p160 = pneg %p159
    // Predicated region
    $region29: #{divnorm_forward.1} parent=5 // pred_check
      _
    $region30: #{divnorm_forward.1} parent=5 // pred_check_branch
      %162 = sbr.rel (%p159) target = $region32
    $region31: #{divnorm_forward.1} parent=5 // pred_region
      %s163 = ssub.s32 %s9, 1
      %s164 = smul.u32 2, %s19
      %p165 = scmp.lt.s32.totalorder %s18, 1
      %s166 = scalar_select %p165, %s18, 1
      %p167 = scmp.lt.s32.totalorder %s164, 1
      %s168 = scalar_select %p167, %s164, 1
      %s169 = smul.addr %s166, 2
      %s170 = sadd.s32 %s168, %s169
      %s171 = smul.addr %s170, 4
      %s172 = scalar_lea.vmem %s0, %s171
      %p173 = pneg %p49
      %p174 = pneg %p46
      %p175 = pneg %p70
      %p176 = pneg %p67
      %p177 = pneg %p91
      %p178 = pneg %p88
      %p179 = pneg %p119
      %p180 = pneg %p116
      %s181 = smul.u32 2, %s19
      %p182 = scmp.lt.s32.totalorder %s18, 1
      %s183 = scalar_select %p182, %s18, 1
      %p184 = scmp.lt.s32.totalorder %s181, 1
      %s185 = scalar_select %p184, %s181, 1
      %s186 = smul.addr %s183, 2
      %s187 = sadd.s32 %s185, %s186
      %s188 = smul.addr %s187, 4
      %s189 = scalar_lea.vmem %s3, %s188
      %s190 = smul.u32 2, %s19
      %p191 = scmp.lt.s32.totalorder %s18, 1
      %s192 = scalar_select %p191, %s18, 1
      %p193 = scmp.lt.s32.totalorder %s190, 1
      %s194 = scalar_select %p193, %s190, 1
      %s195 = smul.addr %s192, 2
      %s196 = sadd.s32 %s194, %s195
      %s197 = smul.addr %s196, 4
      %s198 = scalar_lea.vmem %s0, %s197
      %s199 = smul.u32 2, %s19
      %s200 = smul.u32 2, %s19
      %p201 = scmp.lt.s32.totalorder %s18, 1
      %s202 = scalar_select %p201, %s18, 1
      %p203 = scmp.lt.s32.totalorder %s200, 1
      %s204 = scalar_select %p203, %s200, 1
      %s205 = smul.addr %s202, 2
      %s206 = sadd.s32 %s204, %s205
      %s207 = smul.addr %s206, 4
      %s208 = scalar_lea.vmem %s3, %s207
      %s209 = smul.u32 2, %s19
      %v210 = vld [vmem:[%s198] sm:$0xff]
      %v211 = vmax.f32 %v210, 0.0
      %v212 = vld [vmem:[%s1] sm:$0xf]
      %v213 = vld [vmem:[%s2] sm:$0xf]
      %215 = vset.pattern.permute.xlu0 0
      %216 = vperm.xlu0 %215, %v213
      %v217 = vpop.permute.xlu0 %216
      %v220 = vcombine.high %v211, %v211
      %vm221 = vcmask 31744
      %v223 = vsel %vm221, %v212, 0
      %vm225 = vcmask 1043456
      %v226 = vsel %vm225, %v211, 0
      %v228 = vsel %vm225, %v220, 0
      %v230 = vand.u32 %v228, 4294901760
      %231 = vmatprep.subr.mxu0 %v230
      %v232 = vand.u32 %v226, 4294901760
      %233 = vmatpush1.msra.mxu0 %v232
      %234 = vmatprep.subr.mxu0 0.0
      %235 = vmatpush1.msra.mxu0 0.0
      %236 = vmatprep.subr.mxu0 0.0
      %237 = vmatpush1.msra.mxu0 0.0
      %238 = vmatprep.subr.mxu0 0.0
      %239 = vmatpush1.msra.mxu0 0.0
      %240 = vmatprep.subr.mxu0 0.0
      %241 = vmatpush1.msra.mxu0 0.0
      %242 = vmatprep.subr.mxu0 0.0
      %243 = vmatpush1.msra.mxu0 0.0
      %244 = vmatprep.subr.mxu0 0.0
      %245 = vmatpush1.msra.mxu0 0.0
      %246 = vmatprep.subr.mxu0 0.0
      %247 = vmatpush1.msra.mxu0 0.0
      %248 = vmatprep.subr.mxu0 0.0
      %249 = vmatpush1.msra.mxu0 0.0
      %250 = vmatprep.subr.mxu0 0.0
      %251 = vmatpush1.msra.mxu0 0.0
      %252 = vmatprep.subr.mxu0 0.0
      %253 = vmatpush1.msra.mxu0 0.0
      %254 = vmatprep.subr.mxu0 0.0
      %255 = vmatpush1.msra.mxu0 0.0
      %256 = vmatprep.subr.mxu0 0.0
      %257 = vmatpush1.msra.mxu0 0.0
      %258 = vmatprep.subr.mxu0 0.0
      %259 = vmatpush1.msra.mxu0 0.0
      %260 = vmatprep.subr.mxu0 0.0
      %261 = vmatpush1.msra.mxu0 0.0
      %262 = vmatprep.subr.mxu0 0.0
      %263 = vmatpush1.msra.mxu0 0.0
      %264 = vmatprep.subr.mxu0 0.0
      %265 = vmatpush1.msra.mxu0 0.0
      %266 = vmatprep.subr.mxu0 0.0
      %267 = vmatpush1.msra.mxu0 0.0
      %268 = vmatprep.subr.mxu0 0.0
      %269 = vmatpush1.msra.mxu0 0.0
      %270 = vmatprep.subr.mxu0 0.0
      %271 = vmatpush1.msra.mxu0 0.0
      %272 = vmatprep.subr.mxu0 0.0
      %273 = vmatpush1.msra.mxu0 0.0
      %274 = vmatprep.subr.mxu0 0.0
      %275 = vmatpush1.msra.mxu0 0.0
      %276 = vmatprep.subr.mxu0 0.0
      %277 = vmatpush1.msra.mxu0 0.0
      %278 = vmatprep.subr.mxu0 0.0
      %279 = vmatpush1.msra.mxu0 0.0
      %280 = vmatprep.subr.mxu0 0.0
      %281 = vmatpush1.msra.mxu0 0.0
      %282 = vmatprep.subr.mxu0 0.0
      %283 = vmatpush1.msra.mxu0 0.0
      %284 = vmatprep.subr.mxu0 0.0
      %285 = vmatpush1.msra.mxu0 0.0
      %286 = vmatprep.subr.mxu0 0.0
      %287 = vmatpush1.msra.mxu0 0.0
      %288 = vmatprep.subr.mxu0 0.0
      %289 = vmatpush1.msra.mxu0 0.0
      %290 = vmatprep.subr.mxu0 0.0
      %291 = vmatpush1.msra.mxu0 0.0
      %292 = vmatprep.subr.mxu0 0.0
      %293 = vmatpush1.msra.mxu0 0.0
      %294 = vmatprep.subr.mxu0 0.0
      %295 = vmatpush1.msra.mxu0 0.0
      %296 = vmatprep.mubr.f32.mxu0 0.0
      %v297 = vand.u32 %v223, 4294901760
      %v298 = vsub.f32 %v223, %v297
      %v299 = vand.u32 %v298, 4294901760
      %v300 = vsub.f32 %v298, %v299
      %v301 = vand.u32 %v300, 4294901760
      %302 = vmatmul.mubr.f32.gmra.mrb[0].mxu0 %v301
      %v303 = vpop.f32.mrb[0].mxu0
      %v304 = vadd.f32 %v217, %v303
      %v305 = vpop.f32.mrb[0].mxu0
      %v306 = vadd.f32 %v217, %v305
      %307 = vdwg.mxu0
      %v308 = vand.u32 %v228, 4294901760
      %v309 = vsub.f32 %v228, %v308
      %v310 = vand.u32 %v309, 4294901760
      %v311 = vsub.f32 %v309, %v310
      %v312 = vand.u32 %v311, 4294901760
      %313 = vmatprep.subr.mxu0 %v312
      %v314 = vand.u32 %v226, 4294901760
      %v315 = vsub.f32 %v226, %v314
      %v316 = vand.u32 %v315, 4294901760
      %v317 = vsub.f32 %v315, %v316
      %v318 = vand.u32 %v317, 4294901760
      %319 = vmatpush1.msra.mxu0 %v318
      %320 = vmatprep.subr.mxu0 0.0
      %321 = vmatpush1.msra.mxu0 0.0
      %322 = vmatprep.subr.mxu0 0.0
      %323 = vmatpush1.msra.mxu0 0.0
      %324 = vmatprep.subr.mxu0 0.0
      %325 = vmatpush1.msra.mxu0 0.0
      %326 = vmatprep.subr.mxu0 0.0
      %327 = vmatpush1.msra.mxu0 0.0
      %328 = vmatprep.subr.mxu0 0.0
      %329 = vmatpush1.msra.mxu0 0.0
      %330 = vmatprep.subr.mxu0 0.0
      %331 = vmatpush1.msra.mxu0 0.0
      %332 = vmatprep.subr.mxu0 0.0
      %333 = vmatpush1.msra.mxu0 0.0
      %334 = vmatprep.subr.mxu0 0.0
      %335 = vmatpush1.msra.mxu0 0.0
      %336 = vmatprep.subr.mxu0 0.0
      %337 = vmatpush1.msra.mxu0 0.0
      %338 = vmatprep.subr.mxu0 0.0
      %339 = vmatpush1.msra.mxu0 0.0
      %340 = vmatprep.subr.mxu0 0.0
      %341 = vmatpush1.msra.mxu0 0.0
      %342 = vmatprep.subr.mxu0 0.0
      %343 = vmatpush1.msra.mxu0 0.0
      %344 = vmatprep.subr.mxu0 0.0
      %345 = vmatpush1.msra.mxu0 0.0
      %346 = vmatprep.subr.mxu0 0.0
      %347 = vmatpush1.msra.mxu0 0.0
      %348 = vmatprep.subr.mxu0 0.0
      %349 = vmatpush1.msra.mxu0 0.0
      %350 = vmatprep.subr.mxu0 0.0
      %351 = vmatpush1.msra.mxu0 0.0
      %352 = vmatprep.subr.mxu0 0.0
      %353 = vmatpush1.msra.mxu0 0.0
      %354 = vmatprep.subr.mxu0 0.0
      %355 = vmatpush1.msra.mxu0 0.0
      %356 = vmatprep.subr.mxu0 0.0
      %357 = vmatpush1.msra.mxu0 0.0
      %358 = vmatprep.subr.mxu0 0.0
      %359 = vmatpush1.msra.mxu0 0.0
      %360 = vmatprep.subr.mxu0 0.0
      %361 = vmatpush1.msra.mxu0 0.0
      %362 = vmatprep.subr.mxu0 0.0
      %363 = vmatpush1.msra.mxu0 0.0
      %364 = vmatprep.subr.mxu0 0.0
      %365 = vmatpush1.msra.mxu0 0.0
      %366 = vmatprep.subr.mxu0 0.0
      %367 = vmatpush1.msra.mxu0 0.0
      %368 = vmatprep.subr.mxu0 0.0
      %369 = vmatpush1.msra.mxu0 0.0
      %370 = vmatprep.subr.mxu0 0.0
      %371 = vmatpush1.msra.mxu0 0.0
      %372 = vmatprep.subr.mxu0 0.0
      %373 = vmatpush1.msra.mxu0 0.0
      %374 = vmatprep.subr.mxu0 0.0
      %375 = vmatpush1.msra.mxu0 0.0
      %376 = vmatprep.subr.mxu0 0.0
      %377 = vmatpush1.msra.mxu0 0.0
      %378 = vmatprep.subr.mxu0 0.0
      %379 = vmatpush1.msra.mxu0 0.0
      %380 = vmatprep.subr.mxu0 0.0
      %381 = vmatpush1.msra.mxu0 0.0
      %382 = vmatprep.mubr.f32.mxu0 0.0
      %v383 = vand.u32 %v223, 4294901760
      %384 = vmatmul.mubr.f32.gmra.mrb[0].mxu0 %v383
      %v385 = vpop.f32.mrb[0].mxu0
      %v386 = vadd.f32 %v304, %v385
      %v387 = vpop.f32.mrb[0].mxu0
      %v388 = vadd.f32 %v306, %v387
      %389 = vdwg.mxu0
      %v390 = vand.u32 %v228, 4294901760
      %v391 = vsub.f32 %v228, %v390
      %392 = vmatprep.subr.mxu0 %v391
      %v393 = vand.u32 %v226, 4294901760
      %v394 = vsub.f32 %v226, %v393
      %395 = vmatpush1.msra.mxu0 %v394
      %396 = vmatprep.subr.mxu0 0.0
      %397 = vmatpush1.msra.mxu0 0.0
      %398 = vmatprep.subr.mxu0 0.0
      %399 = vmatpush1.msra.mxu0 0.0
      %400 = vmatprep.subr.mxu0 0.0
      %401 = vmatpush1.msra.mxu0 0.0
      %402 = vmatprep.subr.mxu0 0.0
      %403 = vmatpush1.msra.mxu0 0.0
      %404 = vmatprep.subr.mxu0 0.0
      %405 = vmatpush1.msra.mxu0 0.0
      %406 = vmatprep.subr.mxu0 0.0
      %407 = vmatpush1.msra.mxu0 0.0
      %408 = vmatprep.subr.mxu0 0.0
      %409 = vmatpush1.msra.mxu0 0.0
      %410 = vmatprep.subr.mxu0 0.0
      %411 = vmatpush1.msra.mxu0 0.0
      %412 = vmatprep.subr.mxu0 0.0
      %413 = vmatpush1.msra.mxu0 0.0
      %414 = vmatprep.subr.mxu0 0.0
      %415 = vmatpush1.msra.mxu0 0.0
      %416 = vmatprep.subr.mxu0 0.0
      %417 = vmatpush1.msra.mxu0 0.0
      %418 = vmatprep.subr.mxu0 0.0
      %419 = vmatpush1.msra.mxu0 0.0
      %420 = vmatprep.subr.mxu0 0.0
      %421 = vmatpush1.msra.mxu0 0.0
      %422 = vmatprep.subr.mxu0 0.0
      %423 = vmatpush1.msra.mxu0 0.0
      %424 = vmatprep.subr.mxu0 0.0
      %425 = vmatpush1.msra.mxu0 0.0
      %426 = vmatprep.subr.mxu0 0.0
      %427 = vmatpush1.msra.mxu0 0.0
      %428 = vmatprep.subr.mxu0 0.0
      %429 = vmatpush1.msra.mxu0 0.0
      %430 = vmatprep.subr.mxu0 0.0
      %431 = vmatpush1.msra.mxu0 0.0
      %432 = vmatprep.subr.mxu0 0.0
      %433 = vmatpush1.msra.mxu0 0.0
      %434 = vmatprep.subr.mxu0 0.0
      %435 = vmatpush1.msra.mxu0 0.0
      %436 = vmatprep.subr.mxu0 0.0
      %437 = vmatpush1.msra.mxu0 0.0
      %438 = vmatprep.subr.mxu0 0.0
      %439 = vmatpush1.msra.mxu0 0.0
      %440 = vmatprep.subr.mxu0 0.0
      %441 = vmatpush1.msra.mxu0 0.0
      %442 = vmatprep.subr.mxu0 0.0
      %443 = vmatpush1.msra.mxu0 0.0
      %444 = vmatprep.subr.mxu0 0.0
      %445 = vmatpush1.msra.mxu0 0.0
      %446 = vmatprep.subr.mxu0 0.0
      %447 = vmatpush1.msra.mxu0 0.0
      %448 = vmatprep.subr.mxu0 0.0
      %449 = vmatpush1.msra.mxu0 0.0
      %450 = vmatprep.subr.mxu0 0.0
      %451 = vmatpush1.msra.mxu0 0.0
      %452 = vmatprep.subr.mxu0 0.0
      %453 = vmatpush1.msra.mxu0 0.0
      %454 = vmatprep.subr.mxu0 0.0
      %455 = vmatpush1.msra.mxu0 0.0
      %456 = vmatprep.subr.mxu0 0.0
      %457 = vmatpush1.msra.mxu0 0.0
      %458 = vmatprep.mubr.f32.mxu0 0.0
      %v459 = vand.u32 %v223, 4294901760
      %v460 = vsub.f32 %v223, %v459
      %461 = vmatmul.mubr.f32.gmra.mrb[0].mxu0 %v460
      %v462 = vpop.f32.mrb[0].mxu0
      %v463 = vadd.f32 %v386, %v462
      %v464 = vpop.f32.mrb[0].mxu0
      %v465 = vadd.f32 %v388, %v464
      %466 = vdwg.mxu0
      %v467 = vand.u32 %v228, 4294901760
      %468 = vmatprep.subr.mxu0 %v467
      %v469 = vand.u32 %v226, 4294901760
      %470 = vmatpush1.msra.mxu0 %v469
      %471 = vmatprep.subr.mxu0 0.0
      %472 = vmatpush1.msra.mxu0 0.0
      %473 = vmatprep.subr.mxu0 0.0
      %474 = vmatpush1.msra.mxu0 0.0
      %475 = vmatprep.subr.mxu0 0.0
      %476 = vmatpush1.msra.mxu0 0.0
      %477 = vmatprep.subr.mxu0 0.0
      %478 = vmatpush1.msra.mxu0 0.0
      %479 = vmatprep.subr.mxu0 0.0
      %480 = vmatpush1.msra.mxu0 0.0
      %481 = vmatprep.subr.mxu0 0.0
      %482 = vmatpush1.msra.mxu0 0.0
      %483 = vmatprep.subr.mxu0 0.0
      %484 = vmatpush1.msra.mxu0 0.0
      %485 = vmatprep.subr.mxu0 0.0
      %486 = vmatpush1.msra.mxu0 0.0
      %487 = vmatprep.subr.mxu0 0.0
      %488 = vmatpush1.msra.mxu0 0.0
      %489 = vmatprep.subr.mxu0 0.0
      %490 = vmatpush1.msra.mxu0 0.0
      %491 = vmatprep.subr.mxu0 0.0
      %492 = vmatpush1.msra.mxu0 0.0
      %493 = vmatprep.subr.mxu0 0.0
      %494 = vmatpush1.msra.mxu0 0.0
      %495 = vmatprep.subr.mxu0 0.0
      %496 = vmatpush1.msra.mxu0 0.0
      %497 = vmatprep.subr.mxu0 0.0
      %498 = vmatpush1.msra.mxu0 0.0
      %499 = vmatprep.subr.mxu0 0.0
      %500 = vmatpush1.msra.mxu0 0.0
      %501 = vmatprep.subr.mxu0 0.0
      %502 = vmatpush1.msra.mxu0 0.0
      %503 = vmatprep.subr.mxu0 0.0
      %504 = vmatpush1.msra.mxu0 0.0
      %505 = vmatprep.subr.mxu0 0.0
      %506 = vmatpush1.msra.mxu0 0.0
      %507 = vmatprep.subr.mxu0 0.0
      %508 = vmatpush1.msra.mxu0 0.0
      %509 = vmatprep.subr.mxu0 0.0
      %510 = vmatpush1.msra.mxu0 0.0
      %511 = vmatprep.subr.mxu0 0.0
      %512 = vmatpush1.msra.mxu0 0.0
      %513 = vmatprep.subr.mxu0 0.0
      %514 = vmatpush1.msra.mxu0 0.0
      %515 = vmatprep.subr.mxu0 0.0
      %516 = vmatpush1.msra.mxu0 0.0
      %517 = vmatprep.subr.mxu0 0.0
      %518 = vmatpush1.msra.mxu0 0.0
      %519 = vmatprep.subr.mxu0 0.0
      %520 = vmatpush1.msra.mxu0 0.0
      %521 = vmatprep.subr.mxu0 0.0
      %522 = vmatpush1.msra.mxu0 0.0
      %523 = vmatprep.subr.mxu0 0.0
      %524 = vmatpush1.msra.mxu0 0.0
      %525 = vmatprep.subr.mxu0 0.0
      %526 = vmatpush1.msra.mxu0 0.0
      %527 = vmatprep.subr.mxu0 0.0
      %528 = vmatpush1.msra.mxu0 0.0
      %529 = vmatprep.subr.mxu0 0.0
      %530 = vmatpush1.msra.mxu0 0.0
      %531 = vmatprep.subr.mxu0 0.0
      %532 = vmatpush1.msra.mxu0 0.0
      %533 = vmatprep.mubr.f32.mxu0 0.0
      %v534 = vand.u32 %v223, 4294901760
      %v535 = vsub.f32 %v223, %v534
      %v536 = vand.u32 %v535, 4294901760
      %537 = vmatmul.mubr.f32.gmra.mrb[0].mxu0 %v536
      %v538 = vpop.f32.mrb[0].mxu0
      %v539 = vadd.f32 %v463, %v538
      %v540 = vpop.f32.mrb[0].mxu0
      %v541 = vadd.f32 %v465, %v540
      %542 = vdwg.mxu0
      %v543 = vand.u32 %v228, 4294901760
      %v544 = vsub.f32 %v228, %v543
      %v545 = vand.u32 %v544, 4294901760
      %546 = vmatprep.subr.mxu0 %v545
      %v547 = vand.u32 %v226, 4294901760
      %v548 = vsub.f32 %v226, %v547
      %v549 = vand.u32 %v548, 4294901760
      %550 = vmatpush1.msra.mxu0 %v549
      %551 = vmatprep.subr.mxu0 0.0
      %552 = vmatpush1.msra.mxu0 0.0
      %553 = vmatprep.subr.mxu0 0.0
      %554 = vmatpush1.msra.mxu0 0.0
      %555 = vmatprep.subr.mxu0 0.0
      %556 = vmatpush1.msra.mxu0 0.0
      %557 = vmatprep.subr.mxu0 0.0
      %558 = vmatpush1.msra.mxu0 0.0
      %559 = vmatprep.subr.mxu0 0.0
      %560 = vmatpush1.msra.mxu0 0.0
      %561 = vmatprep.subr.mxu0 0.0
      %562 = vmatpush1.msra.mxu0 0.0
      %563 = vmatprep.subr.mxu0 0.0
      %564 = vmatpush1.msra.mxu0 0.0
      %565 = vmatprep.subr.mxu0 0.0
      %566 = vmatpush1.msra.mxu0 0.0
      %567 = vmatprep.subr.mxu0 0.0
      %568 = vmatpush1.msra.mxu0 0.0
      %569 = vmatprep.subr.mxu0 0.0
      %570 = vmatpush1.msra.mxu0 0.0
      %571 = vmatprep.subr.mxu0 0.0
      %572 = vmatpush1.msra.mxu0 0.0
      %573 = vmatprep.subr.mxu0 0.0
      %574 = vmatpush1.msra.mxu0 0.0
      %575 = vmatprep.subr.mxu0 0.0
      %576 = vmatpush1.msra.mxu0 0.0
      %577 = vmatprep.subr.mxu0 0.0
      %578 = vmatpush1.msra.mxu0 0.0
      %579 = vmatprep.subr.mxu0 0.0
      %580 = vmatpush1.msra.mxu0 0.0
      %581 = vmatprep.subr.mxu0 0.0
      %582 = vmatpush1.msra.mxu0 0.0
      %583 = vmatprep.subr.mxu0 0.0
      %584 = vmatpush1.msra.mxu0 0.0
      %585 = vmatprep.subr.mxu0 0.0
      %586 = vmatpush1.msra.mxu0 0.0
      %587 = vmatprep.subr.mxu0 0.0
      %588 = vmatpush1.msra.mxu0 0.0
      %589 = vmatprep.subr.mxu0 0.0
      %590 = vmatpush1.msra.mxu0 0.0
      %591 = vmatprep.subr.mxu0 0.0
      %592 = vmatpush1.msra.mxu0 0.0
      %593 = vmatprep.subr.mxu0 0.0
      %594 = vmatpush1.msra.mxu0 0.0
      %595 = vmatprep.subr.mxu0 0.0
      %596 = vmatpush1.msra.mxu0 0.0
      %597 = vmatprep.subr.mxu0 0.0
      %598 = vmatpush1.msra.mxu0 0.0
      %599 = vmatprep.subr.mxu0 0.0
      %600 = vmatpush1.msra.mxu0 0.0
      %601 = vmatprep.subr.mxu0 0.0
      %602 = vmatpush1.msra.mxu0 0.0
      %603 = vmatprep.subr.mxu0 0.0
      %604 = vmatpush1.msra.mxu0 0.0
      %605 = vmatprep.subr.mxu0 0.0
      %606 = vmatpush1.msra.mxu0 0.0
      %607 = vmatprep.subr.mxu0 0.0
      %608 = vmatpush1.msra.mxu0 0.0
      %609 = vmatprep.subr.mxu0 0.0
      %610 = vmatpush1.msra.mxu0 0.0
      %611 = vmatprep.subr.mxu0 0.0
      %612 = vmatpush1.msra.mxu0 0.0
      %613 = vmatprep.mubr.f32.mxu0 0.0
      %v614 = vand.u32 %v223, 4294901760
      %615 = vmatmul.mubr.f32.gmra.mrb[0].mxu0 %v614
      %v616 = vpop.f32.mrb[0].mxu0
      %v617 = vadd.f32 %v539, %v616
      %v618 = vpop.f32.mrb[0].mxu0
      %v619 = vadd.f32 %v541, %v618
      %620 = vdwg.mxu0
      %v621 = vand.u32 %v228, 4294901760
      %622 = vmatprep.subr.mxu0 %v621
      %v623 = vand.u32 %v226, 4294901760
      %624 = vmatpush1.msra.mxu0 %v623
      %625 = vmatprep.subr.mxu0 0.0
      %626 = vmatpush1.msra.mxu0 0.0
      %627 = vmatprep.subr.mxu0 0.0
      %628 = vmatpush1.msra.mxu0 0.0
      %629 = vmatprep.subr.mxu0 0.0
      %630 = vmatpush1.msra.mxu0 0.0
      %631 = vmatprep.subr.mxu0 0.0
      %632 = vmatpush1.msra.mxu0 0.0
      %633 = vmatprep.subr.mxu0 0.0
      %634 = vmatpush1.msra.mxu0 0.0
      %635 = vmatprep.subr.mxu0 0.0
      %636 = vmatpush1.msra.mxu0 0.0
      %637 = vmatprep.subr.mxu0 0.0
      %638 = vmatpush1.msra.mxu0 0.0
      %639 = vmatprep.subr.mxu0 0.0
      %640 = vmatpush1.msra.mxu0 0.0
      %641 = vmatprep.subr.mxu0 0.0
      %642 = vmatpush1.msra.mxu0 0.0
      %643 = vmatprep.subr.mxu0 0.0
      %644 = vmatpush1.msra.mxu0 0.0
      %645 = vmatprep.subr.mxu0 0.0
      %646 = vmatpush1.msra.mxu0 0.0
      %647 = vmatprep.subr.mxu0 0.0
      %648 = vmatpush1.msra.mxu0 0.0
      %649 = vmatprep.subr.mxu0 0.0
      %650 = vmatpush1.msra.mxu0 0.0
      %651 = vmatprep.subr.mxu0 0.0
      %652 = vmatpush1.msra.mxu0 0.0
      %653 = vmatprep.subr.mxu0 0.0
      %654 = vmatpush1.msra.mxu0 0.0
      %655 = vmatprep.subr.mxu0 0.0
      %656 = vmatpush1.msra.mxu0 0.0
      %657 = vmatprep.subr.mxu0 0.0
      %658 = vmatpush1.msra.mxu0 0.0
      %659 = vmatprep.subr.mxu0 0.0
      %660 = vmatpush1.msra.mxu0 0.0
      %661 = vmatprep.subr.mxu0 0.0
      %662 = vmatpush1.msra.mxu0 0.0
      %663 = vmatprep.subr.mxu0 0.0
      %664 = vmatpush1.msra.mxu0 0.0
      %665 = vmatprep.subr.mxu0 0.0
      %666 = vmatpush1.msra.mxu0 0.0
      %667 = vmatprep.subr.mxu0 0.0
      %668 = vmatpush1.msra.mxu0 0.0
      %669 = vmatprep.subr.mxu0 0.0
      %670 = vmatpush1.msra.mxu0 0.0
      %671 = vmatprep.subr.mxu0 0.0
      %672 = vmatpush1.msra.mxu0 0.0
      %673 = vmatprep.subr.mxu0 0.0
      %674 = vmatpush1.msra.mxu0 0.0
      %675 = vmatprep.subr.mxu0 0.0
      %676 = vmatpush1.msra.mxu0 0.0
      %677 = vmatprep.subr.mxu0 0.0
      %678 = vmatpush1.msra.mxu0 0.0
      %679 = vmatprep.subr.mxu0 0.0
      %680 = vmatpush1.msra.mxu0 0.0
      %681 = vmatprep.subr.mxu0 0.0
      %682 = vmatpush1.msra.mxu0 0.0
      %683 = vmatprep.subr.mxu0 0.0
      %684 = vmatpush1.msra.mxu0 0.0
      %685 = vmatprep.subr.mxu0 0.0
      %686 = vmatpush1.msra.mxu0 0.0
      %687 = vmatprep.mubr.f32.mxu0 0.0
      %v688 = vand.u32 %v223, 4294901760
      %689 = vmatmul.mubr.f32.gmra.mrb[0].mxu0 %v688
      %v690 = vpop.f32.mrb[0].mxu0
      %v691 = vadd.f32 %v617, %v690
      %v692 = vpop.f32.mrb[0].mxu0
      %v693 = vadd.f32 %v619, %v692
      %694 = vdwg.mxu0
      %v695 = vmax.f32 %v691, 0.001
      %v696 = vmax.f32 %v693, 0.001
      %v697 = vrcp.pop %v695
      %v698 = vrcp.pop %v696
      %v701 = vcombine.low %v697, %v698
      %v703 = vmul.f32 %v211, %v701
      %704 = vst [vmem:[%s208] sm:$0xff] %v703
      %s705 = smul.u32 2, %s19
      %p706 = scmp.lt.s32.totalorder %s18, 1
      %s707 = scalar_select %p706, %s18, 1
      %p708 = scmp.lt.s32.totalorder %s705, 1
      %s709 = scalar_select %p708, %s705, 1
      %s710 = smul.addr %s707, 2
      %s711 = sadd.s32 %s709, %s710
      %s712 = smul.addr %s711, 4
      %s713 = scalar_lea.vmem %s3, %s712
      // Predicated region
      $region33: #{divnorm_forward.1} parent=31 // pred_check
        %p714 = pneg %p116
      $region34: #{divnorm_forward.1} parent=31 // pred_check_branch
        %716 = sbr.rel (%p714) target = $region36
      $region35: #{divnorm_forward.1} parent=31 // pred_region
        %s717 = smul.u32 2, %s19
      $region36: #{divnorm_forward.1} parent=31 // pred_fallthru
        _
    $region32: #{divnorm_forward.1} parent=5 // pred_fallthru
      _
    %p718 = scmp.le.s32.totalorder 2, %s9
    // Predicated region
    $region37: #{divnorm_forward.1} parent=5 // pred_check
      %p719 = pneg %p718
    $region38: #{divnorm_forward.1} parent=5 // pred_check_branch
      %721 = sbr.rel (%p719) target = $region40
    $region39: #{divnorm_forward.1} parent=5 // pred_region
      %s722 = ssub.s32 %s9, 2
      // Predicated region
      $region41: #{divnorm_forward.1} parent=39 // pred_check
        %p723 = pneg %p122
      $region42: #{divnorm_forward.1} parent=39 // pred_check_branch
        %725 = sbr.rel (%p723) target = $region44
      $region43: #{divnorm_forward.1} parent=39 // pred_region
        %s726 = smul.u32 2, %s21
        %p727 = scmp.lt.s32.totalorder %s20, 1
        %s728 = scalar_select %p727, %s20, 1
        %p729 = scmp.lt.s32.totalorder %s726, 1
        %s730 = scalar_select %p729, %s726, 1
        %s731 = smul.addr %s728, 2
        %s732 = sadd.s32 %s730, %s731
        %s733 = smul.addr %s732, 4
        %s734 = scalar_lea.vmem %s3, %s733
      $region44: #{divnorm_forward.1} parent=39 // pred_fallthru
        _
    $region40: #{divnorm_forward.1} parent=5 // pred_fallthru
      _
  $region6: #{divnorm_forward.1} parent=0 // loop_footer
    %s13 = sadd.s32 1, %s9
  $region7: #{divnorm_forward.1} parent=0 // loop_footer_branch
    %8 = sbr.rel target = $region3
  $region8: #{divnorm_forward.1} parent=0 // loop_exit
    _

</llo_original>
